<compile_context>
chip_gen: v7x
topology: tpu7x:2x2x1
jax: 0.10.0
libtpu: 0.0.40
codegen_flags: <defaults>
</compile_context>

<pallas_src>
import functools

import jax
import jax.numpy as jnp
from jax import lax
from jax.experimental import pallas as pl
from jax.experimental.pallas import tpu as pltpu


def _round_up(x: int, m: int) -> int:
    return ((x + m - 1) // m) * m


def _margin2_kernel(txt_ref, vis_ref, ftxt_ref, t2t_ref, cost_ref,
                    acc_t2t_ref, acc_cost_ref, *,
                    block_rows, batch,
                    bottommargin, uppermargin,
                    bottommargin_t2t, uppermargin_t2t):
    i = pl.program_id(0)                 # batch-tile reduction axis ("arbitrary")
    last = pl.num_programs(0) - 1

    @pl.when(i == 0)
    def _init():
        acc_t2t_ref[...] = jnp.zeros_like(acc_t2t_ref)
        acc_cost_ref[...] = jnp.zeros_like(acc_cost_ref)

    # Inputs may be bf16 upstream; cast after load (DMA moves the narrow dtype).
    txt = txt_ref[...].astype(jnp.float32)
    vis = vis_ref[...].astype(jnp.float32)
    ftxt = ftxt_ref[...].astype(jnp.float32)

    eps = jnp.float32(1e-13 + 1e-14)     # matches l2norm(): sqrt(sumsq) + 1e-13 + 1e-14

    # "dot then scale": lane reductions first, then per-row (tb, 1) scaling —
    # no full-width (tb, D) divides.
    ss_t = jnp.sum(txt * txt, axis=1, keepdims=True)
    ss_v = jnp.sum(vis * vis, axis=1, keepdims=True)
    ss_f = jnp.sum(ftxt * ftxt, axis=1, keepdims=True)
    d_tv = jnp.sum(txt * vis, axis=1, keepdims=True)
    d_fv = jnp.sum(ftxt * vis, axis=1, keepdims=True)
    d_ft = jnp.sum(ftxt * txt, axis=1, keepdims=True)

    # approx=True: the three divides go to the otherwise-idle EUP slot.
    inv_t = pl.reciprocal(jnp.sqrt(ss_t) + eps, approx=True)
    inv_v = pl.reciprocal(jnp.sqrt(ss_v) + eps, approx=True)
    inv_f = pl.reciprocal(jnp.sqrt(ss_f) + eps, approx=True)

    scorest = d_tv * (inv_t * inv_v)     # sim(txt,  vis)
    scoresf = d_fv * (inv_f * inv_v)     # sim(ftxt, vis)
    scoresf2 = d_ft * (inv_f * inv_t)    # sim(ftxt, txt)

    zeros = jnp.zeros_like(scorest)

    cost = zeros
    if bottommargin is not None:
        cost = cost + jnp.maximum(bottommargin + scoresf - scorest, 0.0)
    if uppermargin is not None:
        cost = cost + jnp.maximum(-uppermargin - scoresf + scorest, 0.0)

    cost_t2t = zeros
    if bottommargin_t2t is not None:
        cost_t2t = cost_t2t + jnp.maximum(bottommargin_t2t + scoresf2 - scorest, 0.0)
    if uppermargin_t2t is not None:
        cost_t2t = cost_t2t + jnp.maximum(-uppermargin_t2t - scoresf2 + scorest, 0.0)

    # Mask the batch-padding rows of the (possibly partial) edge tile BEFORE the
    # partial-sum accumulation; garbage (even NaN/Inf) in discarded rows is
    # safely replaced by 0 by the select.
    row_ids = i * block_rows + lax.broadcasted_iota(jnp.int32, (block_rows, 1), 0)
    valid = row_ids < batch
    cost = jnp.where(valid, cost, 0.0)
    cost_t2t = jnp.where(valid, cost_t2t, 0.0)

    # Plain VPU adds into (tb, 1) VMEM accumulators; the cross-sublane
    # reduction to a scalar happens once, in the finalize branch.
    acc_t2t_ref[...] += cost_t2t
    acc_cost_ref[...] += cost

    @pl.when(i == last)
    def _finalize():
        # Lane-dense (8, 128) stores; wrapper reads element [0, 0].
        t2t_ref[...] = jnp.full(t2t_ref.shape, jnp.sum(acc_t2t_ref[...]),
                                dtype=jnp.float32)
        cost_ref[...] = jnp.full(cost_ref.shape, jnp.sum(acc_cost_ref[...]),
                                 dtype=jnp.float32)


def margin2_loss(txt_embs, vis_embs, false_txt_embs, *,
                 bottommargin, uppermargin,
                 bottommargin_t2t, uppermargin_t2t,
                 cost_style='sum',
                 block_rows=1024,
                 vmem_limit_bytes=48 * 1024 * 1024):
    """Pallas implementation of Margin2Loss.forward (measure='cosine').

    Returns (cost_t2t, cost) as float32 scalars (same order as PyTorch).
    On 128 MiB-VMEM v5e/v6e, larger `block_rows` / `vmem_limit_bytes` (64-96 MiB)
    buy a few extra % of HBM roofline; the defaults are v7x-safe (64 MiB VMEM).
    """
    assert txt_embs.shape == vis_embs.shape == false_txt_embs.shape
    assert txt_embs.ndim == 2
    B, D = txt_embs.shape
    itemsize = jnp.dtype(txt_embs.dtype).itemsize

    # VMEM accounting: 3 inputs x up-to-3 pipeline buffers in the input dtype,
    # plus headroom for in-kernel f32 casts / multiply-reduce temporaries
    # (~4 f32 copies of one (tb, D) tile if Mosaic does not fully fuse them).
    n_bufs = 3
    temps_f32 = 4
    bytes_per_row = D * (3 * n_bufs * itemsize + temps_f32 * 4)
    vmem_budget = max(vmem_limit_bytes - 8 * 1024 * 1024, 8 * 1024 * 1024)
    max_tb = max(8, (vmem_budget // bytes_per_row) // 8 * 8)
    tb = min(_round_up(min(block_rows, B), 8), max_tb)

    num_tiles = pl.cdiv(B, tb)   # no padding: edge tile is partial + masked

    kernel = functools.partial(
        _margin2_kernel,
        block_rows=tb, batch=B,
        bottommargin=bottommargin, uppermargin=uppermargin,
        bottommargin_t2t=bottommargin_t2t, uppermargin_t2t=uppermargin_t2t)

    if num_tiles >= 3:
        # Third buffer keeps two DMAs in flight on this DMA-gated loop.
        in_spec = pl.BlockSpec((tb, D), lambda i: (i, 0),
                               pipeline_mode=pl.Buffered(3))
    else:
        in_spec = pl.BlockSpec((tb, D), lambda i: (i, 0))

    out_spec = pl.BlockSpec((8, 128), lambda i: (0, 0))
    out_struct = jax.ShapeDtypeStruct((8, 128), jnp.float32)

    cost_est = pl.CostEstimate(
        flops=12 * B * D,
        transcendentals=6 * B,
        bytes_accessed=3 * B * D * itemsize + 2 * 8 * 128 * 4)

    t2t_part, cost_part = pl.pallas_call(
        kernel,
        out_shape=(out_struct, out_struct),
        grid_spec=pltpu.PrefetchScalarGridSpec(
            num_scalar_prefetch=0,
            grid=(num_tiles,),
            in_specs=[in_spec, in_spec, in_spec],
            out_specs=[out_spec, out_spec],
            scratch_shapes=[pltpu.VMEM((tb, 1), jnp.float32),
                            pltpu.VMEM((tb, 1), jnp.float32)]),
        compiler_params=pltpu.CompilerParams(
            dimension_semantics=("arbitrary",),
            vmem_limit_bytes=vmem_limit_bytes),
        cost_estimate=cost_est,
    )(txt_embs, vis_embs, false_txt_embs)

    cost_t2t = t2t_part[0, 0]
    cost = cost_part[0, 0]

    n = jnp.float32(B)
    if (uppermargin is not None) or (bottommargin is not None):
        if cost_style != 'sum':
            cost = cost / n
    else:
        cost = jnp.float32(0.0)        # PyTorch returns the python int 0 here
    if (uppermargin_t2t is not None) or (bottommargin_t2t is not None):
        if cost_style != 'sum':
            cost_t2t = cost_t2t / n
    else:
        cost_t2t = jnp.float32(0.0)

    return cost_t2t, cost


def _reference(txt, vis, ftxt, bm, um, bm2, um2, cost_style='sum'):
    """Pure-JAX reference (mirrors the PyTorch module)."""
    def l2norm(x):
        return x / (jnp.sqrt(jnp.sum(x * x, axis=1, keepdims=True)) + 1e-13 + 1e-14)

    def sim(a, b):
        return jnp.sum(l2norm(a) * l2norm(b), axis=1)[None, :]

    st, sf, sf2 = sim(txt, vis), sim(ftxt, vis), sim(ftxt, txt)
    cost = jnp.maximum(bm + sf - st, 0) + jnp.maximum(-um - sf + st, 0)
    cost_t2t = jnp.maximum(bm2 + sf2 - st, 0) + jnp.maximum(-um2 - sf2 + st, 0)
    red = jnp.sum if cost_style == 'sum' else jnp.mean
    return red(cost_t2t), red(cost)


if __name__ == "__main__":
    key = jax.random.PRNGKey(0)
    bm, um = 0.2, 0.8
    bm2, um2 = 0.1, 0.9

    def check(batch, hidden, cost_style, block_rows):
        k1, k2, k3 = jax.random.split(
            jax.random.fold_in(key, batch * 1000 + hidden), 3)
        txt = jax.random.normal(k1, (batch, hidden), dtype=jnp.float32)
        vis = jax.random.normal(k2, (batch, hidden), dtype=jnp.float32)
        ftxt = jax.random.normal(k3, (batch, hidden), dtype=jnp.float32)

        got_t2t, got_cost = margin2_loss(
            txt, vis, ftxt,
            bottommargin=bm, uppermargin=um,
            bottommargin_t2t=bm2, uppermargin_t2t=um2,
            cost_style=cost_style, block_rows=block_rows)
        jax.block_until_ready((got_t2t, got_cost))

        ref_t2t, ref_cost = _reference(txt, vis, ftxt, bm, um, bm2, um2, cost_style)
        # Tolerances leave room for the approx (EUP) reciprocal.
        assert jnp.allclose(got_t2t, ref_t2t, rtol=1e-3, atol=1e-3), (
            batch, hidden, cost_style, got_t2t, ref_t2t)
        assert jnp.allclose(got_cost, ref_cost, rtol=1e-3, atol=1e-3), (
            batch, hidden, cost_style, got_cost, ref_cost)

    # Primary small case (module-consistent shapes): single tile.
    check(batch=8, hidden=32, cost_style='sum', block_rows=1024)
    check(batch=8, hidden=32, cost_style='mean', block_rows=1024)
    # Multi-tile, non-divisible batch: partial edge tile is masked in-kernel
    # (no wrapper padding); also exercises the triple-buffered pipeline.
    check(batch=300, hidden=128, cost_style='sum', block_rows=64)

    print("KERNEL_OK")
</pallas_src>

<mosaic_0001>
module attributes {stable_mosaic.version = 11 : i64} {
  func.func @_margin2_kernel(%arg0: i32, %arg1: memref<8x32xf32, #tpu.memory_space<vmem>>, %arg2: memref<8x32xf32, #tpu.memory_space<vmem>>, %arg3: memref<8x32xf32, #tpu.memory_space<vmem>>, %arg4: memref<8x128xf32, #tpu.memory_space<vmem>>, %arg5: memref<8x128xf32, #tpu.memory_space<vmem>>, %arg6: memref<8x1xf32, #tpu.memory_space<vmem>>, %arg7: memref<8x1xf32, #tpu.memory_space<vmem>>) attributes {dimension_semantics = [#tpu.dimension_semantics<arbitrary>], iteration_bounds = array<i64: 1>, scalar_prefetch = 0 : i64, scratch_operands = 2 : i64, tpu.core_type = #tpu.core_type<tc>, window_params = [{transform_indices = @transform_0, window_bounds = array<i64: 8, 32>}, {transform_indices = @transform_1, window_bounds = array<i64: 8, 32>}, {transform_indices = @transform_2, window_bounds = array<i64: 8, 32>}, {pipeline_mode = #tpu.pipeline_mode<synchronous>, transform_indices = @transform_3, window_bounds = array<i64: 8, 128>}, {pipeline_mode = #tpu.pipeline_mode<synchronous>, transform_indices = @transform_4, window_bounds = array<i64: 8, 128>}]} {
    %c0_i32 = arith.constant 0 : i32
    %0 = arith.cmpi eq, %arg0, %c0_i32 : i32
    %1 = arith.extui %0 : i1 to i32
    %c0_i32_0 = arith.constant 0 : i32
    %2 = arith.cmpi ne, %1, %c0_i32_0 : i32
    scf.if %2 {
      %cst_36 = arith.constant 0.000000e+00 : f32
      %86 = vector.broadcast %cst_36 : f32 to vector<8x1xf32>
      %c0_37 = arith.constant 0 : index
      %c0_38 = arith.constant 0 : index
      %87 = vector.load %arg6[%c0_37, %c0_38] : memref<8x1xf32, #tpu.memory_space<vmem>>, vector<8x1xf32>
      tpu.vector_store %arg6[%c0_37, %c0_38], %86 {strides = array<i32>} : memref<8x1xf32, #tpu.memory_space<vmem>>, vector<8x1xf32>,
      %cst_39 = arith.constant 0.000000e+00 : f32
      %88 = vector.broadcast %cst_39 : f32 to vector<8x1xf32>
      %c0_40 = arith.constant 0 : index
      %c0_41 = arith.constant 0 : index
      %89 = vector.load %arg7[%c0_40, %c0_41] : memref<8x1xf32, #tpu.memory_space<vmem>>, vector<8x1xf32>
      tpu.vector_store %arg7[%c0_40, %c0_41], %88 {strides = array<i32>} : memref<8x1xf32, #tpu.memory_space<vmem>>, vector<8x1xf32>,
    } else {
    }
    %c0 = arith.constant 0 : index
    %c0_1 = arith.constant 0 : index
    %3 = vector.load %arg1[%c0, %c0_1] : memref<8x32xf32, #tpu.memory_space<vmem>>, vector<8x32xf32>
    %c0_2 = arith.constant 0 : index
    %c0_3 = arith.constant 0 : index
    %4 = vector.load %arg2[%c0_2, %c0_3] : memref<8x32xf32, #tpu.memory_space<vmem>>, vector<8x32xf32>
    %c0_4 = arith.constant 0 : index
    %c0_5 = arith.constant 0 : index
    %5 = vector.load %arg3[%c0_4, %c0_5] : memref<8x32xf32, #tpu.memory_space<vmem>>, vector<8x32xf32>
    %6 = arith.mulf %3, %3 : vector<8x32xf32>
    %cst = arith.constant dense<0.000000e+00> : vector<8xf32>
    %7 = vector.multi_reduction <add>, %6, %cst [1] : vector<8x32xf32> to vector<8xf32>
    %8 = vector.shape_cast %7 : vector<8xf32> to vector<8x1xf32>
    %9 = arith.mulf %4, %4 : vector<8x32xf32>
    %cst_6 = arith.constant dense<0.000000e+00> : vector<8xf32>
    %10 = vector.multi_reduction <add>, %9, %cst_6 [1] : vector<8x32xf32> to vector<8xf32>
    %11 = vector.shape_cast %10 : vector<8xf32> to vector<8x1xf32>
    %12 = arith.mulf %5, %5 : vector<8x32xf32>
    %cst_7 = arith.constant dense<0.000000e+00> : vector<8xf32>
    %13 = vector.multi_reduction <add>, %12, %cst_7 [1] : vector<8x32xf32> to vector<8xf32>
    %14 = vector.shape_cast %13 : vector<8xf32> to vector<8x1xf32>
    %15 = arith.mulf %3, %4 : vector<8x32xf32>
    %cst_8 = arith.constant dense<0.000000e+00> : vector<8xf32>
    %16 = vector.multi_reduction <add>, %15, %cst_8 [1] : vector<8x32xf32> to vector<8xf32>
    %17 = vector.shape_cast %16 : vector<8xf32> to vector<8x1xf32>
    %18 = arith.mulf %5, %4 : vector<8x32xf32>
    %cst_9 = arith.constant dense<0.000000e+00> : vector<8xf32>
    %19 = vector.multi_reduction <add>, %18, %cst_9 [1] : vector<8x32xf32> to vector<8xf32>
    %20 = vector.shape_cast %19 : vector<8xf32> to vector<8x1xf32>
    %21 = arith.mulf %5, %3 : vector<8x32xf32>
    %cst_10 = arith.constant dense<0.000000e+00> : vector<8xf32>
    %22 = vector.multi_reduction <add>, %21, %cst_10 [1] : vector<8x32xf32> to vector<8xf32>
    %23 = vector.shape_cast %22 : vector<8xf32> to vector<8x1xf32>
    %24 = math.sqrt %8 : vector<8x1xf32>
    %cst_11 = arith.constant 1.100000e-13 : f32
    %25 = vector.broadcast %cst_11 : f32 to vector<8x1xf32>
    %26 = arith.addf %24, %25 : vector<8x1xf32>
    %27 = tpu.reciprocal %26 {approx = true} : vector<8x1xf32> -> vector<8x1xf32>
    %28 = math.sqrt %11 : vector<8x1xf32>
    %cst_12 = arith.constant 1.100000e-13 : f32
    %29 = vector.broadcast %cst_12 : f32 to vector<8x1xf32>
    %30 = arith.addf %28, %29 : vector<8x1xf32>
    %31 = tpu.reciprocal %30 {approx = true} : vector<8x1xf32> -> vector<8x1xf32>
    %32 = math.sqrt %14 : vector<8x1xf32>
    %cst_13 = arith.constant 1.100000e-13 : f32
    %33 = vector.broadcast %cst_13 : f32 to vector<8x1xf32>
    %34 = arith.addf %32, %33 : vector<8x1xf32>
    %35 = tpu.reciprocal %34 {approx = true} : vector<8x1xf32> -> vector<8x1xf32>
    %36 = arith.mulf %27, %31 : vector<8x1xf32>
    %37 = arith.mulf %17, %36 : vector<8x1xf32>
    %38 = arith.mulf %35, %31 : vector<8x1xf32>
    %39 = arith.mulf %20, %38 : vector<8x1xf32>
    %40 = arith.mulf %35, %27 : vector<8x1xf32>
    %41 = arith.mulf %23, %40 : vector<8x1xf32>
    %cst_14 = arith.constant 0.000000e+00 : f32
    %42 = vector.broadcast %cst_14 : f32 to vector<8x1xf32>
    %cst_15 = arith.constant 2.000000e-01 : f32
    %43 = vector.broadcast %cst_15 : f32 to vector<8x1xf32>
    %44 = arith.addf %43, %39 : vector<8x1xf32>
    %45 = arith.subf %44, %37 : vector<8x1xf32>
    %cst_16 = arith.constant 0.000000e+00 : f32
    %46 = vector.broadcast %cst_16 : f32 to vector<8x1xf32>
    %47 = arith.maximumf %45, %46 : vector<8x1xf32>
    %48 = arith.addf %42, %47 : vector<8x1xf32>
    %cst_17 = arith.constant -8.000000e-01 : f32
    %49 = vector.broadcast %cst_17 : f32 to vector<8x1xf32>
    %50 = arith.subf %49, %39 : vector<8x1xf32>
    %51 = arith.addf %50, %37 : vector<8x1xf32>
    %cst_18 = arith.constant 0.000000e+00 : f32
    %52 = vector.broadcast %cst_18 : f32 to vector<8x1xf32>
    %53 = arith.maximumf %51, %52 : vector<8x1xf32>
    %54 = arith.addf %48, %53 : vector<8x1xf32>
    %cst_19 = arith.constant 1.000000e-01 : f32
    %55 = vector.broadcast %cst_19 : f32 to vector<8x1xf32>
    %56 = arith.addf %55, %41 : vector<8x1xf32>
    %57 = arith.subf %56, %37 : vector<8x1xf32>
    %cst_20 = arith.constant 0.000000e+00 : f32
    %58 = vector.broadcast %cst_20 : f32 to vector<8x1xf32>
    %59 = arith.maximumf %57, %58 : vector<8x1xf32>
    %60 = arith.addf %42, %59 : vector<8x1xf32>
    %cst_21 = arith.constant -0.899999976 : f32
    %61 = vector.broadcast %cst_21 : f32 to vector<8x1xf32>
    %62 = arith.subf %61, %41 : vector<8x1xf32>
    %63 = arith.addf %62, %37 : vector<8x1xf32>
    %cst_22 = arith.constant 0.000000e+00 : f32
    %64 = vector.broadcast %cst_22 : f32 to vector<8x1xf32>
    %65 = arith.maximumf %63, %64 : vector<8x1xf32>
    %66 = arith.addf %60, %65 : vector<8x1xf32>
    %c8_i32 = arith.constant 8 : i32
    %67 = arith.muli %arg0, %c8_i32 : i32
    %68 = tpu.iota {dimensions = array<i32: 0>} : vector<8x1xi32>
    %69 = vector.broadcast %67 : i32 to vector<8x1xi32>
    %70 = arith.addi %69, %68 : vector<8x1xi32>
    %c8_i32_23 = arith.constant 8 : i32
    %71 = vector.broadcast %c8_i32_23 : i32 to vector<8x1xi32>
    %72 = arith.cmpi slt, %70, %71 : vector<8x1xi32>
    %cst_24 = arith.constant 0.000000e+00 : f32
    %73 = vector.broadcast %cst_24 : f32 to vector<8x1xf32>
    %74 = arith.select %72, %54, %73 : vector<8x1xi1>, vector<8x1xf32>
    %cst_25 = arith.constant 0.000000e+00 : f32
    %75 = vector.broadcast %cst_25 : f32 to vector<8x1xf32>
    %76 = arith.select %72, %66, %75 : vector<8x1xi1>, vector<8x1xf32>
    %c0_26 = arith.constant 0 : index
    %c0_27 = arith.constant 0 : index
    %77 = vector.load %arg6[%c0_26, %c0_27] : memref<8x1xf32, #tpu.memory_space<vmem>>, vector<8x1xf32>
    %78 = arith.addf %77, %76 : vector<8x1xf32>
    %c0_28 = arith.constant 0 : index
    %c0_29 = arith.constant 0 : index
    %79 = vector.load %arg6[%c0_28, %c0_29] : memref<8x1xf32, #tpu.memory_space<vmem>>, vector<8x1xf32>
    tpu.vector_store %arg6[%c0_28, %c0_29], %78 {strides = array<i32>} : memref<8x1xf32, #tpu.memory_space<vmem>>, vector<8x1xf32>,
    %c0_30 = arith.constant 0 : index
    %c0_31 = arith.constant 0 : index
    %80 = vector.load %arg7[%c0_30, %c0_31] : memref<8x1xf32, #tpu.memory_space<vmem>>, vector<8x1xf32>
    %81 = arith.addf %80, %74 : vector<8x1xf32>
    %c0_32 = arith.constant 0 : index
    %c0_33 = arith.constant 0 : index
    %82 = vector.load %arg7[%c0_32, %c0_33] : memref<8x1xf32, #tpu.memory_space<vmem>>, vector<8x1xf32>
    tpu.vector_store %arg7[%c0_32, %c0_33], %81 {strides = array<i32>} : memref<8x1xf32, #tpu.memory_space<vmem>>, vector<8x1xf32>,
    %c0_i32_34 = arith.constant 0 : i32
    %83 = arith.cmpi eq, %arg0, %c0_i32_34 : i32
    %84 = arith.extui %83 : i1 to i32
    %c0_i32_35 = arith.constant 0 : i32
    %85 = arith.cmpi ne, %84, %c0_i32_35 : i32
    scf.if %85 {
      %c0_36 = arith.constant 0 : index
      %c0_37 = arith.constant 0 : index
      %86 = vector.load %arg6[%c0_36, %c0_37] : memref<8x1xf32, #tpu.memory_space<vmem>>, vector<8x1xf32>
      %87 = vector.shape_cast %86 : vector<8x1xf32> to vector<1x8x1xf32>
      %cst_38 = arith.constant dense<0.000000e+00> : vector<1xf32>
      %88 = vector.multi_reduction <add>, %87, %cst_38 [1, 2] : vector<1x8x1xf32> to vector<1xf32>
      %89 = vector.shape_cast %88 : vector<1xf32> to vector<1x1x1xf32>
      %90 = vector.extract %89[0, 0, 0] : f32 from vector<1x1x1xf32>
      %91 = vector.broadcast %90 : f32 to vector<8x128xf32>
      %c0_39 = arith.constant 0 : index
      %c0_40 = arith.constant 0 : index
      %92 = vector.load %arg4[%c0_39, %c0_40] : memref<8x128xf32, #tpu.memory_space<vmem>>, vector<8x128xf32>
      tpu.vector_store %arg4[%c0_39, %c0_40], %91 {strides = array<i32>} : memref<8x128xf32, #tpu.memory_space<vmem>>, vector<8x128xf32>,
      %c0_41 = arith.constant 0 : index
      %c0_42 = arith.constant 0 : index
      %93 = vector.load %arg7[%c0_41, %c0_42] : memref<8x1xf32, #tpu.memory_space<vmem>>, vector<8x1xf32>
      %94 = vector.shape_cast %93 : vector<8x1xf32> to vector<1x8x1xf32>
      %cst_43 = arith.constant dense<0.000000e+00> : vector<1xf32>
      %95 = vector.multi_reduction <add>, %94, %cst_43 [1, 2] : vector<1x8x1xf32> to vector<1xf32>
      %96 = vector.shape_cast %95 : vector<1xf32> to vector<1x1x1xf32>
      %97 = vector.extract %96[0, 0, 0] : f32 from vector<1x1x1xf32>
      %98 = vector.broadcast %97 : f32 to vector<8x128xf32>
      %c0_44 = arith.constant 0 : index
      %c0_45 = arith.constant 0 : index
      %99 = vector.load %arg5[%c0_44, %c0_45] : memref<8x128xf32, #tpu.memory_space<vmem>>, vector<8x128xf32>
      tpu.vector_store %arg5[%c0_44, %c0_45], %98 {strides = array<i32>} : memref<8x128xf32, #tpu.memory_space<vmem>>, vector<8x128xf32>,
    } else {
    }
    return
  }
  func.func @transform_0(%arg0: i32) -> (i32, i32) {
    %c0_i32 = arith.constant 0 : i32
    %c0_i32_0 = arith.constant 0 : i32
    return %arg0, %c0_i32 : i32, i32
  }
  func.func @transform_1(%arg0: i32) -> (i32, i32) {
    %c0_i32 = arith.constant 0 : i32
    %c0_i32_0 = arith.constant 0 : i32
    return %arg0, %c0_i32 : i32, i32
  }
  func.func @transform_2(%arg0: i32) -> (i32, i32) {
    %c0_i32 = arith.constant 0 : i32
    %c0_i32_0 = arith.constant 0 : i32
    return %arg0, %c0_i32 : i32, i32
  }
  func.func @transform_3(%arg0: i32) -> (i32, i32) {
    %c0_i32 = arith.constant 0 : i32
    %c0_i32_0 = arith.constant 0 : i32
    %c0_i32_1 = arith.constant 0 : i32
    return %c0_i32, %c0_i32_0 : i32, i32
  }
  func.func @transform_4(%arg0: i32) -> (i32, i32) {
    %c0_i32 = arith.constant 0 : i32
    %c0_i32_0 = arith.constant 0 : i32
    %c0_i32_1 = arith.constant 0 : i32
    return %c0_i32, %c0_i32_0 : i32, i32
  }
}

</mosaic_0001>

<llo_original>
// kernel: tpu_custom_call.1
$region0: #{tpu_custom_call.1}
  #allocation0 [shape = 'u32[]', space=smem, size = 0x4, offset = 0x4, fixed_abs, tag = 'smem constant byte address 0x4 - core index']
  #allocation1 [shape = 'u32[144,128]{1,0:T(1,128)}', space=vmem, size = 0x12000, scoped, tag = 'internal scratch']
  #allocation2 [shape = 'f32[8,1]{1,0:T(8,128)}', space=vmem, size = 0x1000, scoped, tag = 'scratch operand']
  #allocation3 [shape = 'f32[8,1]{1,0:T(8,128)}', space=vmem, size = 0x1000, scoped, tag = 'scratch operand']
  %s0 = inlined_call_operand.hbm [shape: f32[8,32], index: 0, kind: input, shape index: {}]
  %s1 = inlined_call_operand.hbm [shape: f32[8,32], index: 1, kind: input, shape index: {}]
  %s2 = inlined_call_operand.hbm [shape: f32[8,32], index: 2, kind: input, shape index: {}]
  %s3 = inlined_call_operand.hbm [shape: f32[8,128], index: 3, kind: output, shape index: {0}]
  %s4 = inlined_call_operand.hbm [shape: f32[8,128], index: 4, kind: output, shape index: {1}]
  %5 = xla_tuple %s3, %s4
  %s6 = sld [smem:[#allocation0]]
  $region50: #{tpu_custom_call.1} parent=0
    _
  %s8 = ssub.s32 1, %s6
  %s9 = scalar_select 0, %s8, %s6
  $region1: #{tpu_custom_call.1} parent=0
    #allocation4 [shape = 'u8[4096]{0}', space=vmem, size = 0x1000, scoped, tag = 'input window, operand 0, single buffered']
    #allocation5 [shape = 's32[1]{0}', space=sflag, size = 0x4, scoped, tag = 'scoped memory for tpu_custom_call.1']
    #allocation6 [shape = 's32[1]{0}', space=sflag, size = 0x4, scoped, tag = 'scoped memory for tpu_custom_call.1']
    #allocation7 [shape = 'u8[4096]{0}', space=vmem, size = 0x1000, scoped, tag = 'input window, operand 1, single buffered']
    #allocation8 [shape = 's32[1]{0}', space=sflag, size = 0x4, scoped, tag = 'scoped memory for tpu_custom_call.1']
    #allocation9 [shape = 'u8[4096]{0}', space=vmem, size = 0x1000, scoped, tag = 'input window, operand 2, single buffered']
    #allocation10 [shape = 'u8[4096]{0}', space=vmem, size = 0x1000, scoped, tag = 'output window, operand 0, single buffered']
    #allocation11 [shape = 'u8[4096]{0}', space=vmem, size = 0x1000, scoped, tag = 'output window, operand 1, single buffered']
    #allocation12 [shape = 's32[1]{0}', space=sflag, size = 0x4, scoped, tag = 'scoped memory for tpu_custom_call.1']
    %10 = vsyncpa [#allocation5], 0
    %11 = vsyncpa [#allocation8], 0
    %12 = vsyncpa [#allocation6], 0
    %13 = vsyncpa [#allocation12], 0
    // Predicated region
    $region2: #{tpu_custom_call.1} parent=1 // pred_check
      _
    $region3: #{tpu_custom_call.1} parent=1 // pred_check_branch
      %15 = sbr.rel (0) target = $region5
    $region4: #{tpu_custom_call.1} parent=1 // pred_region
      %s17 = ssub.s32 128, 128
      %18 = vsyncadd [#allocation5], %s17
      %s20 = sshll.u32 [#allocation4], 4
      %s21 = int_to_ptr.vmem [resolvable:$true] %s20
      %23 = dma.hbm_to_vmem [thread:$0]  %s0, 128, %s21, [#allocation5]
    $region5: #{tpu_custom_call.1} parent=1 // pred_fallthru
      _
    // Predicated region
    $region6: #{tpu_custom_call.1} parent=1 // pred_check
      _
    $region7: #{tpu_custom_call.1} parent=1 // pred_check_branch
      %25 = sbr.rel (0) target = $region9
    $region8: #{tpu_custom_call.1} parent=1 // pred_region
      %s27 = ssub.s32 128, 128
      %28 = vsyncadd [#allocation8], %s27
      %s30 = sshll.u32 [#allocation7], 4
      %s31 = int_to_ptr.vmem [resolvable:$true] %s30
      %33 = dma.hbm_to_vmem [thread:$0]  %s1, 128, %s31, [#allocation8]
    $region9: #{tpu_custom_call.1} parent=1 // pred_fallthru
      _
    // Predicated region
    $region10: #{tpu_custom_call.1} parent=1 // pred_check
      _
    $region11: #{tpu_custom_call.1} parent=1 // pred_check_branch
      %35 = sbr.rel (0) target = $region13
    $region12: #{tpu_custom_call.1} parent=1 // pred_region
      %s37 = ssub.s32 128, 128
      %38 = vsyncadd [#allocation8], %s37
      %s40 = sshll.u32 [#allocation9], 4
      %s41 = int_to_ptr.vmem [resolvable:$true] %s40
      %43 = dma.hbm_to_vmem [thread:$0]  %s2, 128, %s41, [#allocation8]
    $region13: #{tpu_custom_call.1} parent=1 // pred_fallthru
      _
    // Predicated region
    $region14: #{tpu_custom_call.1} parent=1 // pred_check
      _
    $region15: #{tpu_custom_call.1} parent=1 // pred_check_branch
      %45 = sbr.rel (0) target = $region17
    $region16: #{tpu_custom_call.1} parent=1 // pred_region
      %46 = dma.done [#allocation5], 128
    $region17: #{tpu_custom_call.1} parent=1 // pred_fallthru
      _
    // Predicated region
    $region18: #{tpu_custom_call.1} parent=1 // pred_check
      _
    $region19: #{tpu_custom_call.1} parent=1 // pred_check_branch
      %48 = sbr.rel (0) target = $region21
    $region20: #{tpu_custom_call.1} parent=1 // pred_region
      %49 = dma.done [#allocation8], 128
    $region21: #{tpu_custom_call.1} parent=1 // pred_fallthru
      _
    // Predicated region
    $region22: #{tpu_custom_call.1} parent=1 // pred_check
      _
    $region23: #{tpu_custom_call.1} parent=1 // pred_check_branch
      %51 = sbr.rel (0) target = $region25
    $region24: #{tpu_custom_call.1} parent=1 // pred_region
      %52 = dma.done [#allocation8], 128
    $region25: #{tpu_custom_call.1} parent=1 // pred_fallthru
      _
    %p53 = scmp.eq.s32.totalorder 0, 0
    // Predicated region
    $region26: #{tpu_custom_call.1} parent=1 // pred_check
      %p54 = pneg %p53
    $region27: #{tpu_custom_call.1} parent=1 // pred_check_branch
      %56 = sbr.rel (%p54) target = $region29
    $region28: #{tpu_custom_call.1} parent=1 // pred_region
      %vm57 = vcmask 7168
      %58 = vst.msk [vmem:[#allocation2] sm:$0xff] %vm57, 0.0
      %59 = vst.msk [vmem:[#allocation3] sm:$0xff] %vm57, 0.0
    $region29: #{tpu_custom_call.1} parent=1 // pred_fallthru
      _
    %v60 = vld [vmem:[#allocation4] sm:$0xff]
    %v61 = vld [vmem:[#allocation7] sm:$0xff]
    %v62 = vld [vmem:[#allocation9] sm:$0xff]
    %v63 = vmul.f32 %v60, %v60
    %vm64 = vcmask 261120
    %v65 = vsel %vm64, %v63, 0.0
    %66 = vadd.xlane.f32.xlu0 %v65
    %v67 = vpop.xlane.xlu0 %66
    %v68 = vmul.f32 %v61, %v61
    %v69 = vsel %vm64, %v68, 0.0
    %70 = vadd.xlane.f32.xlu0 %v69
    %v71 = vpop.xlane.xlu0 %70
    %v72 = vmul.f32 %v62, %v62
    %v73 = vsel %vm64, %v72, 0.0
    %74 = vadd.xlane.f32.xlu0 %v73
    %v75 = vpop.xlane.xlu0 %74
    %v76 = vmul.f32 %v60, %v61
    %v77 = vsel %vm64, %v76, 0.0
    %78 = vadd.xlane.f32.xlu0 %v77
    %v79 = vpop.xlane.xlu0 %78
    %v80 = vmul.f32 %v62, %v61
    %v81 = vsel %vm64, %v80, 0.0
    %82 = vadd.xlane.f32.xlu0 %v81
    %v83 = vpop.xlane.xlu0 %82
    %v84 = vmul.f32 %v62, %v60
    %v85 = vsel %vm64, %v84, 0.0
    %86 = vadd.xlane.f32.xlu0 %v85
    %v87 = vpop.xlane.xlu0 %86
    %v88 = vrsqrt.pop %v67
    %v89 = vmul.f32 %v67, %v88
    %vm90 = vcmp.eq.f32.partialorder %v67, inf
    %v91 = vsel %vm90, %v67, %v89
    %vm92 = vcmp.eq.f32.partialorder %v67, 0.0
    %v93 = vand.u32 %v67, 2147483648
    %v94 = vsel %vm92, %v93, %v91
    %v95 = vadd.f32 %v94, 1.1e-13
    %v96 = vrcp.pop %v95
    %v97 = vrsqrt.pop %v71
    %v98 = vmul.f32 %v71, %v97
    %vm99 = vcmp.eq.f32.partialorder %v71, inf
    %v100 = vsel %vm99, %v71, %v98
    %vm101 = vcmp.eq.f32.partialorder %v71, 0.0
    %v102 = vand.u32 %v71, 2147483648
    %v103 = vsel %vm101, %v102, %v100
    %v104 = vadd.f32 %v103, 1.1e-13
    %v105 = vrcp.pop %v104
    %v106 = vrsqrt.pop %v75
    %v107 = vmul.f32 %v75, %v106
    %vm108 = vcmp.eq.f32.partialorder %v75, inf
    %v109 = vsel %vm108, %v75, %v107
    %vm110 = vcmp.eq.f32.partialorder %v75, 0.0
    %v111 = vand.u32 %v75, 2147483648
    %v112 = vsel %vm110, %v111, %v109
    %v113 = vadd.f32 %v112, 1.1e-13
    %v114 = vrcp.pop %v113
    %v115 = vmul.f32 %v96, %v105
    %v116 = vmul.f32 %v79, %v115
    %v117 = vmul.f32 %v114, %v105
    %v118 = vmul.f32 %v83, %v117
    %v119 = vmul.f32 %v114, %v96
    %v120 = vmul.f32 %v87, %v119
    %v121 = vadd.f32 %v118, 0.2
    %v122 = vsub.f32 %v121, %v116
    %v123 = vmax.f32 %v122, 0.0
    %v124 = vadd.f32 %v123, 0.0
    %v125 = vsub.f32 -0.8, %v118
    %v126 = vadd.f32 %v125, %v116
    %v127 = vmax.f32 %v126, 0.0
    %v128 = vadd.f32 %v124, %v127
    %v129 = vadd.f32 %v120, 0.1
    %v130 = vsub.f32 %v129, %v116
    %v131 = vmax.f32 %v130, 0.0
    %v132 = vadd.f32 %v131, 0.0
    %v133 = vsub.f32 -0.9, %v120
    %v134 = vadd.f32 %v133, %v116
    %v135 = vmax.f32 %v134, 0.0
    %v136 = vadd.f32 %v132, %v135
    %s137 = smul.u32 0, 8
    %v138 = vlaneseq
    %v139 = vshrl.u32 %v138, 7
    %v140 = vstv %s137
    %v141 = vadd.s32 %v140, %v139
    %vm142 = vcmp.lt.s32.totalorder %v141, 8
    %v143 = vsel %vm142, %v128, 0.0
    %v144 = vsel %vm142, %v136, 0.0
    %v145 = vld [vmem:[#allocation2] sm:$0xff]
    %v146 = vadd.f32 %v145, %v144
    %vm147 = vcmask 7168
    %148 = vst.msk [vmem:[#allocation2] sm:$0xff] %vm147, %v146
    %v149 = vld [vmem:[#allocation3] sm:$0xff]
    %v150 = vadd.f32 %v149, %v143
    %151 = vst.msk [vmem:[#allocation3] sm:$0xff] %vm147, %v150
    // Predicated region
    $region30: #{tpu_custom_call.1} parent=1 // pred_check
      %p152 = pneg %p53
    $region31: #{tpu_custom_call.1} parent=1 // pred_check_branch
      %154 = sbr.rel (%p152) target = $region33
    $region32: #{tpu_custom_call.1} parent=1 // pred_region
      %v155 = vld [vmem:[#allocation2] sm:$0xff]
      %v156 = vsel %vm147, %v155, 0.0
      %157 = vadd.xlane.f32.xlu0 %v156
      %v158 = vpop.xlane.xlu0 %157
      %v159 = vrot.slane %v158, 4
      %v160 = vadd.f32 %v158, %v159
      %v161 = vrot.slane %v160, 2
      %v162 = vadd.f32 %v160, %v161
      %v163 = vrot.slane %v162, 1
      %v164 = vadd.f32 %v162, %v163
      %s165 = vtos %v164
      %v166 = vstv %s165
      %167 = vst [vmem:[#allocation10] sm:$0xff] %v166
      %v168 = vld [vmem:[#allocation3] sm:$0xff]
      %v169 = vsel %vm147, %v168, 0.0
      %170 = vadd.xlane.f32.xlu0 %v169
      %v171 = vpop.xlane.xlu0 %170
      %v172 = vrot.slane %v171, 4
      %v173 = vadd.f32 %v171, %v172
      %v174 = vrot.slane %v173, 2
      %v175 = vadd.f32 %v173, %v174
      %v176 = vrot.slane %v175, 1
      %v177 = vadd.f32 %v175, %v176
      %s178 = vtos %v177
      %v179 = vstv %s178
      %180 = vst [vmem:[#allocation11] sm:$0xff] %v179
    $region33: #{tpu_custom_call.1} parent=1 // pred_fallthru
      _
    // Predicated region
    $region34: #{tpu_custom_call.1} parent=1 // pred_check
      _
    $region35: #{tpu_custom_call.1} parent=1 // pred_check_branch
      %182 = sbr.rel (0) target = $region37
    $region36: #{tpu_custom_call.1} parent=1 // pred_region
      %s184 = ssub.s32 128, 128
      %185 = vsyncadd [#allocation6], %s184
      %s187 = sshll.u32 [#allocation10], 4
      %s188 = int_to_ptr.vmem [resolvable:$true] %s187
      %190 = dma.vmem_to_hbm [thread:$0]  %s188, 128, %s3, [#allocation6]
    $region37: #{tpu_custom_call.1} parent=1 // pred_fallthru
      _
    // Predicated region
    $region38: #{tpu_custom_call.1} parent=1 // pred_check
      _
    $region39: #{tpu_custom_call.1} parent=1 // pred_check_branch
      %192 = sbr.rel (0) target = $region41
    $region40: #{tpu_custom_call.1} parent=1 // pred_region
      %s194 = ssub.s32 128, 128
      %195 = vsyncadd [#allocation12], %s194
      %s197 = sshll.u32 [#allocation11], 4
      %s198 = int_to_ptr.vmem [resolvable:$true] %s197
      %200 = dma.vmem_to_hbm [thread:$0]  %s198, 128, %s4, [#allocation12]
    $region41: #{tpu_custom_call.1} parent=1 // pred_fallthru
      _
    // Predicated region
    $region42: #{tpu_custom_call.1} parent=1 // pred_check
      _
    $region43: #{tpu_custom_call.1} parent=1 // pred_check_branch
      %202 = sbr.rel (0) target = $region45
    $region44: #{tpu_custom_call.1} parent=1 // pred_region
      %203 = dma.done [#allocation6], 128
    $region45: #{tpu_custom_call.1} parent=1 // pred_fallthru
      _
    // Predicated region
    $region46: #{tpu_custom_call.1} parent=1 // pred_check
      _
    $region47: #{tpu_custom_call.1} parent=1 // pred_check_branch
      %205 = sbr.rel (0) target = $region49
    $region48: #{tpu_custom_call.1} parent=1 // pred_region
      %206 = dma.done [#allocation12], 128
    $region49: #{tpu_custom_call.1} parent=1 // pred_fallthru
      _
    %207 = vsyncpa [#allocation5], 1
    %208 = vsyncpa [#allocation8], 1
    %209 = vsyncpa [#allocation6], 1
    %210 = vsyncpa [#allocation12], 1

</llo_original>
